<compile_context>
chip_gen: v7x
topology: tpu7x:2x2x1
jax: 0.10.0
libtpu: 0.0.40
codegen_flags: <defaults>
</compile_context>

<pallas_src>
import functools

import jax
import jax.numpy as jnp
from jax.experimental import pallas as pl
from jax.experimental.pallas import tpu as pltpu

LANE = 128      # hidden feature dims padded to a multiple of this
SUBLANE = 8     # batch tile must be a multiple of this


def _round_up(x, m):
    return (x + m - 1) // m * m


def _pick_batch_tile(batch_p):
    """Batch-tile size. Small batches: one step (grid overhead dominates).
    Large batches: tiles up to ~1024 rows, even number of grid steps so the
    'parallel' axis can shard across both TensorCores on v7x."""
    if batch_p <= 512:
        return batch_p
    n_steps = 2 * ((batch_p + 2047) // 2048)        # even, tiles <= ~1024
    return _round_up((batch_p + n_steps - 1) // n_steps, SUBLANE)


def _mlp_fused_kernel(*refs, num_layers: int):
    # refs = (x_ref, w1, b1, w2, b2, ..., wN, bN, o_ref)
    x_ref = refs[0]
    o_ref = refs[-1]
    wb = refs[1:-1]

    h = x_ref[...]                                          # (tb, in_dim) f32
    for i in range(num_layers):
        w = wb[2 * i][...]                                  # bf16 (d_in, d_out)
        b = wb[2 * i + 1][...]                              # f32  (1, d_out)
        # bf16 x bf16 -> f32 accumulate on the MXU; bias/ReLU in f32 on the VPU.
        h = jnp.dot(h.astype(jnp.bfloat16), w,
                    preferred_element_type=jnp.float32) + b
        if i < num_layers - 1:                              # ReLU on all but last
            h = jnp.maximum(h, 0.0)
    o_ref[...] = h.astype(o_ref.dtype)


def init_net_relu_params(key, input_dim, num_hidden, output_dim):
    """PyTorch-layout params: Linear(input_dim,30), (num_hidden-1)x Linear(30,30),
    Linear(30,output_dim). U(-1/sqrt(fan_in), 1/sqrt(fan_in)) like nn.Linear."""
    dims = [input_dim] + [30] * num_hidden + [output_dim]
    params = []
    for i in range(len(dims) - 1):
        fan_in, fan_out = dims[i], dims[i + 1]
        key, kw, kb = jax.random.split(key, 3)
        bound = 1.0 / jnp.sqrt(fan_in)
        w = jax.random.uniform(kw, (fan_out, fan_in), jnp.float32, -bound, bound)
        b = jax.random.uniform(kb, (fan_out,), jnp.float32, -bound, bound)
        params.append((w, b))
    return params


def prepare_params(params):
    """One-time prep: transpose W to (in, out), zero-pad HIDDEN feature dims to
    LANE multiples, cast weights to bf16; bias -> (1, out) f32.  The first
    layer keeps its true input width and the last its true output width, so
    the input/output arrays need no lane padding (zero padding elsewhere keeps
    the math exact)."""
    n = len(params)
    prepared = []
    for idx, (w, b) in enumerate(params):
        out_d, in_d = w.shape
        in_p = in_d if idx == 0 else _round_up(in_d, LANE)
        out_p = out_d if idx == n - 1 else _round_up(out_d, LANE)
        w_t = jnp.zeros((in_p, out_p), jnp.float32).at[:in_d, :out_d].set(w.T)
        w_t = w_t.astype(jnp.bfloat16)
        b_p = jnp.zeros((1, out_p), jnp.float32).at[:, :out_d].set(b)
        prepared.append((w_t, b_p))
    return prepared


def net_relu_forward(prepared, x, output_dim):
    """Fused forward: one pallas_call over a batch-tiled grid."""
    batch, in_dim = x.shape
    num_layers = len(prepared)
    assert prepared[0][0].shape[0] == in_dim
    assert prepared[-1][0].shape[1] == output_dim

    batch_p = _round_up(batch, SUBLANE)
    tb = _pick_batch_tile(batch_p)
    batch_p = _round_up(batch_p, tb)
    grid = (batch_p // tb,)

    # Only row-pad (cheap) and only when needed; no feature-dim padding of x.
    if batch_p == batch:
        x_in = x
    else:
        x_in = jnp.zeros((batch_p, in_dim), x.dtype).at[:batch].set(x)

    in_specs = [pl.BlockSpec((tb, in_dim), lambda i: (i, 0))]
    flat_args = [x_in]
    for w_t, b_p in prepared:
        # Same (whole) block every grid step -> weights stay resident in VMEM.
        in_specs.append(pl.BlockSpec(w_t.shape, lambda i: (0, 0)))
        in_specs.append(pl.BlockSpec(b_p.shape, lambda i: (0, 0)))
        flat_args.append(w_t)
        flat_args.append(b_p)

    # Resident-VMEM estimate: weights/biases (x2 for default double-buffering)
    # plus double-buffered x/out tiles.  Only set an explicit limit when a
    # scaled-up model would exceed the scoped default.
    resident = sum(int(a.size) * a.dtype.itemsize for a in flat_args[1:])
    tile_bytes = 2 * 2 * tb * (in_dim + output_dim) * 4
    est_vmem = 2 * resident + tile_bytes
    cp_kwargs = dict(dimension_semantics=("parallel",))
    if est_vmem > (24 << 20):
        # TODO(synk): if layer widths grow to many MiB of weights, switch to a
        # per-layer K/N-tiled grid with an accumulator instead of holding all
        # layers resident (v7x has only 64 MiB physical VMEM).
        cp_kwargs["vmem_limit_bytes"] = min(est_vmem + (8 << 20), 96 << 20)

    kernel = functools.partial(_mlp_fused_kernel, num_layers=num_layers)
    out = pl.pallas_call(
        kernel,
        out_shape=jax.ShapeDtypeStruct((batch_p, output_dim), jnp.float32),
        grid=grid,
        in_specs=in_specs,
        out_specs=pl.BlockSpec((tb, output_dim), lambda i: (i, 0)),
        compiler_params=pltpu.CompilerParams(**cp_kwargs),
    )(*flat_args)

    return out if batch_p == batch else out[:batch]


if __name__ == "__main__":
    input_dim, num_hidden, output_dim = 16, 3, 4
    batch = 8

    key = jax.random.PRNGKey(0)
    key, kx = jax.random.split(key)
    x = jax.random.normal(kx, (batch, input_dim), jnp.float32)

    params = init_net_relu_params(key, input_dim, num_hidden, output_dim)
    prepared = prepare_params(params)           # one-time transpose/pad/bf16-cast

    out = net_relu_forward(prepared, x, output_dim)
    out = jax.block_until_ready(out)

    # Reference in plain JAX f32 (same math as the PyTorch forward):
    # ReLU after every layer except the last.
    ref = x
    for i, (w, b) in enumerate(params):
        ref = ref @ w.T + b
        if i < len(params) - 1:
            ref = jnp.maximum(ref, 0.0)

    assert out.shape == (batch, output_dim)
    # bf16 matmul inputs with f32 accumulation: loosen tolerance vs pure f32.
    assert jnp.allclose(out, ref, atol=3e-2, rtol=3e-2), (
        f"max abs err {jnp.max(jnp.abs(out - ref))}")

    print("KERNEL_OK")
</pallas_src>

<mosaic_0001>
module attributes {stable_mosaic.version = 11 : i64} {
  func.func @_mlp_fused_kernel(%arg0: i32, %arg1: memref<8x16xf32, #tpu.memory_space<vmem>>, %arg2: memref<16x128xbf16, #tpu.memory_space<vmem>>, %arg3: memref<1x128xf32, #tpu.memory_space<vmem>>, %arg4: memref<128x128xbf16, #tpu.memory_space<vmem>>, %arg5: memref<1x128xf32, #tpu.memory_space<vmem>>, %arg6: memref<128x128xbf16, #tpu.memory_space<vmem>>, %arg7: memref<1x128xf32, #tpu.memory_space<vmem>>, %arg8: memref<128x4xbf16, #tpu.memory_space<vmem>>, %arg9: memref<1x4xf32, #tpu.memory_space<vmem>>, %arg10: memref<8x4xf32, #tpu.memory_space<vmem>>) attributes {dimension_semantics = [#tpu.dimension_semantics<parallel>], iteration_bounds = array<i64: 1>, scalar_prefetch = 0 : i64, scratch_operands = 0 : i64, tpu.core_type = #tpu.core_type<tc>, window_params = [{transform_indices = @transform_0, window_bounds = array<i64: 8, 16>}, {pipeline_mode = #tpu.pipeline_mode<synchronous>, transform_indices = @transform_1, window_bounds = array<i64: 16, 128>}, {pipeline_mode = #tpu.pipeline_mode<synchronous>, transform_indices = @transform_2, window_bounds = array<i64: 1, 128>}, {pipeline_mode = #tpu.pipeline_mode<synchronous>, transform_indices = @transform_3, window_bounds = array<i64: 128, 128>}, {pipeline_mode = #tpu.pipeline_mode<synchronous>, transform_indices = @transform_4, window_bounds = array<i64: 1, 128>}, {pipeline_mode = #tpu.pipeline_mode<synchronous>, transform_indices = @transform_5, window_bounds = array<i64: 128, 128>}, {pipeline_mode = #tpu.pipeline_mode<synchronous>, transform_indices = @transform_6, window_bounds = array<i64: 1, 128>}, {pipeline_mode = #tpu.pipeline_mode<synchronous>, transform_indices = @transform_7, window_bounds = array<i64: 128, 4>}, {pipeline_mode = #tpu.pipeline_mode<synchronous>, transform_indices = @transform_8, window_bounds = array<i64: 1, 4>}, {transform_indices = @transform_9, window_bounds = array<i64: 8, 4>}]} {
    %c0 = arith.constant 0 : index
    %c0_0 = arith.constant 0 : index
    %0 = vector.load %arg1[%c0, %c0_0] : memref<8x16xf32, #tpu.memory_space<vmem>>, vector<8x16xf32>
    %c0_1 = arith.constant 0 : index
    %c0_2 = arith.constant 0 : index
    %1 = vector.load %arg2[%c0_1, %c0_2] : memref<16x128xbf16, #tpu.memory_space<vmem>>, vector<16x128xbf16>
    %c0_3 = arith.constant 0 : index
    %c0_4 = arith.constant 0 : index
    %2 = vector.load %arg3[%c0_3, %c0_4] : memref<1x128xf32, #tpu.memory_space<vmem>>, vector<1x128xf32>
    %3 = arith.truncf %0 : vector<8x16xf32> to vector<8x16xbf16>
    %cst = arith.constant dense<0.000000e+00> : vector<8x128xf32>
    %4 = tpu.matmul %3, %1, %cst {dimension_numbers = #tpu.dot_dimension_numbers<[1], [0], [0], [1], [0, 0, 1, 1], [], []>} : vector<8x16xbf16>, vector<16x128xbf16>, vector<8x128xf32> -> vector<8x128xf32>
    %5 = vector.broadcast %2 : vector<1x128xf32> to vector<8x128xf32>
    %6 = arith.addf %4, %5 : vector<8x128xf32>
    %cst_5 = arith.constant 0.000000e+00 : f32
    %7 = vector.broadcast %cst_5 : f32 to vector<8x128xf32>
    %8 = arith.maximumf %6, %7 : vector<8x128xf32>
    %c0_6 = arith.constant 0 : index
    %c0_7 = arith.constant 0 : index
    %9 = vector.load %arg4[%c0_6, %c0_7] : memref<128x128xbf16, #tpu.memory_space<vmem>>, vector<128x128xbf16>
    %c0_8 = arith.constant 0 : index
    %c0_9 = arith.constant 0 : index
    %10 = vector.load %arg5[%c0_8, %c0_9] : memref<1x128xf32, #tpu.memory_space<vmem>>, vector<1x128xf32>
    %11 = arith.truncf %8 : vector<8x128xf32> to vector<8x128xbf16>
    %cst_10 = arith.constant dense<0.000000e+00> : vector<8x128xf32>
    %12 = tpu.matmul %11, %9, %cst_10 {dimension_numbers = #tpu.dot_dimension_numbers<[1], [0], [0], [1], [0, 0, 1, 1], [], []>} : vector<8x128xbf16>, vector<128x128xbf16>, vector<8x128xf32> -> vector<8x128xf32>
    %13 = vector.broadcast %10 : vector<1x128xf32> to vector<8x128xf32>
    %14 = arith.addf %12, %13 : vector<8x128xf32>
    %cst_11 = arith.constant 0.000000e+00 : f32
    %15 = vector.broadcast %cst_11 : f32 to vector<8x128xf32>
    %16 = arith.maximumf %14, %15 : vector<8x128xf32>
    %c0_12 = arith.constant 0 : index
    %c0_13 = arith.constant 0 : index
    %17 = vector.load %arg6[%c0_12, %c0_13] : memref<128x128xbf16, #tpu.memory_space<vmem>>, vector<128x128xbf16>
    %c0_14 = arith.constant 0 : index
    %c0_15 = arith.constant 0 : index
    %18 = vector.load %arg7[%c0_14, %c0_15] : memref<1x128xf32, #tpu.memory_space<vmem>>, vector<1x128xf32>
    %19 = arith.truncf %16 : vector<8x128xf32> to vector<8x128xbf16>
    %cst_16 = arith.constant dense<0.000000e+00> : vector<8x128xf32>
    %20 = tpu.matmul %19, %17, %cst_16 {dimension_numbers = #tpu.dot_dimension_numbers<[1], [0], [0], [1], [0, 0, 1, 1], [], []>} : vector<8x128xbf16>, vector<128x128xbf16>, vector<8x128xf32> -> vector<8x128xf32>
    %21 = vector.broadcast %18 : vector<1x128xf32> to vector<8x128xf32>
    %22 = arith.addf %20, %21 : vector<8x128xf32>
    %cst_17 = arith.constant 0.000000e+00 : f32
    %23 = vector.broadcast %cst_17 : f32 to vector<8x128xf32>
    %24 = arith.maximumf %22, %23 : vector<8x128xf32>
    %c0_18 = arith.constant 0 : index
    %c0_19 = arith.constant 0 : index
    %25 = vector.load %arg8[%c0_18, %c0_19] : memref<128x4xbf16, #tpu.memory_space<vmem>>, vector<128x4xbf16>
    %c0_20 = arith.constant 0 : index
    %c0_21 = arith.constant 0 : index
    %26 = vector.load %arg9[%c0_20, %c0_21] : memref<1x4xf32, #tpu.memory_space<vmem>>, vector<1x4xf32>
    %27 = arith.truncf %24 : vector<8x128xf32> to vector<8x128xbf16>
    %cst_22 = arith.constant dense<0.000000e+00> : vector<8x4xf32>
    %28 = tpu.matmul %27, %25, %cst_22 {dimension_numbers = #tpu.dot_dimension_numbers<[1], [0], [0], [1], [0, 0, 1, 1], [], []>} : vector<8x128xbf16>, vector<128x4xbf16>, vector<8x4xf32> -> vector<8x4xf32>
    %29 = vector.broadcast %26 : vector<1x4xf32> to vector<8x4xf32>
    %30 = arith.addf %28, %29 : vector<8x4xf32>
    %c0_23 = arith.constant 0 : index
    %c0_24 = arith.constant 0 : index
    %31 = vector.load %arg10[%c0_23, %c0_24] : memref<8x4xf32, #tpu.memory_space<vmem>>, vector<8x4xf32>
    tpu.vector_store %arg10[%c0_23, %c0_24], %30 {strides = array<i32>} : memref<8x4xf32, #tpu.memory_space<vmem>>, vector<8x4xf32>,
    return
  }
  func.func @transform_0(%arg0: i32) -> (i32, i32) {
    %c0_i32 = arith.constant 0 : i32
    %c0_i32_0 = arith.constant 0 : i32
    return %arg0, %c0_i32 : i32, i32
  }
  func.func @transform_1(%arg0: i32) -> (i32, i32) {
    %c0_i32 = arith.constant 0 : i32
    %c0_i32_0 = arith.constant 0 : i32
    %c0_i32_1 = arith.constant 0 : i32
    return %c0_i32, %c0_i32_0 : i32, i32
  }
  func.func @transform_2(%arg0: i32) -> (i32, i32) {
    %c0_i32 = arith.constant 0 : i32
    %c0_i32_0 = arith.constant 0 : i32
    %c0_i32_1 = arith.constant 0 : i32
    return %c0_i32, %c0_i32_0 : i32, i32
  }
  func.func @transform_3(%arg0: i32) -> (i32, i32) {
    %c0_i32 = arith.constant 0 : i32
    %c0_i32_0 = arith.constant 0 : i32
    %c0_i32_1 = arith.constant 0 : i32
    return %c0_i32, %c0_i32_0 : i32, i32
  }
  func.func @transform_4(%arg0: i32) -> (i32, i32) {
    %c0_i32 = arith.constant 0 : i32
    %c0_i32_0 = arith.constant 0 : i32
    %c0_i32_1 = arith.constant 0 : i32
    return %c0_i32, %c0_i32_0 : i32, i32
  }
  func.func @transform_5(%arg0: i32) -> (i32, i32) {
    %c0_i32 = arith.constant 0 : i32
    %c0_i32_0 = arith.constant 0 : i32
    %c0_i32_1 = arith.constant 0 : i32
    return %c0_i32, %c0_i32_0 : i32, i32
  }
  func.func @transform_6(%arg0: i32) -> (i32, i32) {
    %c0_i32 = arith.constant 0 : i32
    %c0_i32_0 = arith.constant 0 : i32
    %c0_i32_1 = arith.constant 0 : i32
    return %c0_i32, %c0_i32_0 : i32, i32
  }
  func.func @transform_7(%arg0: i32) -> (i32, i32) {
    %c0_i32 = arith.constant 0 : i32
    %c0_i32_0 = arith.constant 0 : i32
    %c0_i32_1 = arith.constant 0 : i32
    return %c0_i32, %c0_i32_0 : i32, i32
  }
  func.func @transform_8(%arg0: i32) -> (i32, i32) {
    %c0_i32 = arith.constant 0 : i32
    %c0_i32_0 = arith.constant 0 : i32
    %c0_i32_1 = arith.constant 0 : i32
    return %c0_i32, %c0_i32_0 : i32, i32
  }
  func.func @transform_9(%arg0: i32) -> (i32, i32) {
    %c0_i32 = arith.constant 0 : i32
    %c0_i32_0 = arith.constant 0 : i32
    return %arg0, %c0_i32 : i32, i32
  }
}

</mosaic_0001>

<llo_original>
// kernel: tpu_custom_call.1
$region0: #{tpu_custom_call.1}
  #allocation0 [shape = 'u32[]', space=smem, size = 0x4, offset = 0x4, fixed_abs, tag = 'smem constant byte address 0x4 - core index']
  #allocation1 [shape = 'u32[144,128]{1,0:T(1,128)}', space=vmem, size = 0x12000, scoped, tag = 'internal scratch']
  %s0 = inlined_call_operand.vmem [shape: f32[8,16], index: 0, kind: input, shape index: {}]
  %s1 = inlined_call_operand.hbm [shape: bf16[16,128], index: 1, kind: input, shape index: {}]
  %s2 = inlined_call_operand.vmem [shape: f32[1,128], index: 2, kind: input, shape index: {}]
  %s3 = inlined_call_operand.vmem [shape: bf16[128,128], index: 3, kind: input, shape index: {}]
  %s4 = inlined_call_operand.vmem [shape: f32[1,128], index: 4, kind: input, shape index: {}]
  %s5 = inlined_call_operand.hbm [shape: bf16[128,128], index: 5, kind: input, shape index: {}]
  %s6 = inlined_call_operand.vmem [shape: f32[1,128], index: 6, kind: input, shape index: {}]
  %s7 = inlined_call_operand.vmem [shape: bf16[128,4], index: 7, kind: input, shape index: {}]
  %s8 = inlined_call_operand.vmem [shape: f32[1,4], index: 8, kind: input, shape index: {}]
  %s9 = inlined_call_operand.vmem [shape: f32[8,4], index: 9, kind: output, shape index: {}]
  %s10 = sld [smem:[#allocation0]]
  $region54: #{tpu_custom_call.1} parent=0
    _
  %s12 = ssub.s32 1, %s10
  %s13 = scalar_select 0, %s12, %s10
  $region1: #{tpu_custom_call.1} parent=0
    #allocation2 [shape = 'u8[4096]{0}', space=vmem, size = 0x1000, scoped, tag = 'input window, operand 1, single buffered']
    #allocation3 [shape = 's32[1]{0}', space=sflag, size = 0x4, scoped, tag = 'scoped memory for tpu_custom_call.1']
    #allocation4 [shape = 'u8[32768]{0}', space=vmem, size = 0x8000, scoped, tag = 'input window, operand 5, single buffered']
    #allocation5 [shape = 's32[1]{0}', space=sflag, size = 0x4, scoped, tag = 'scoped memory for tpu_custom_call.1']
    %14 = vsyncpa [#allocation3], 0
    %15 = vsyncpa [#allocation5], 0
    // Predicated region
    $region2: #{tpu_custom_call.1} parent=1 // pred_check
      _
    $region3: #{tpu_custom_call.1} parent=1 // pred_check_branch
      %17 = sbr.rel (0) target = $region5
    $region4: #{tpu_custom_call.1} parent=1 // pred_region
      _
    $region5: #{tpu_custom_call.1} parent=1 // pred_fallthru
      _
    // Predicated region
    $region6: #{tpu_custom_call.1} parent=1 // pred_check
      _
    $region7: #{tpu_custom_call.1} parent=1 // pred_check_branch
      %19 = sbr.rel (0) target = $region9
    $region8: #{tpu_custom_call.1} parent=1 // pred_region
      %s21 = ssub.s32 128, 128
      %22 = vsyncadd [#allocation3], %s21
      %s23 = sshll.u32 [#allocation2], 4
      %s24 = int_to_ptr.vmem [resolvable:$true] %s23
      %29 = dma.hbm_to_vmem [thread:$0]  %s1, 128, %s24, [#allocation3], 64, 64, 4
    $region9: #{tpu_custom_call.1} parent=1 // pred_fallthru
      _
    // Predicated region
    $region10: #{tpu_custom_call.1} parent=1 // pred_check
      _
    $region11: #{tpu_custom_call.1} parent=1 // pred_check_branch
      %31 = sbr.rel (0) target = $region13
    $region12: #{tpu_custom_call.1} parent=1 // pred_region
      _
    $region13: #{tpu_custom_call.1} parent=1 // pred_fallthru
      _
    // Predicated region
    $region14: #{tpu_custom_call.1} parent=1 // pred_check
      _
    $region15: #{tpu_custom_call.1} parent=1 // pred_check_branch
      %33 = sbr.rel (0) target = $region17
    $region16: #{tpu_custom_call.1} parent=1 // pred_region
      _
    $region17: #{tpu_custom_call.1} parent=1 // pred_fallthru
      _
    // Predicated region
    $region18: #{tpu_custom_call.1} parent=1 // pred_check
      _
    $region19: #{tpu_custom_call.1} parent=1 // pred_check_branch
      %35 = sbr.rel (0) target = $region21
    $region20: #{tpu_custom_call.1} parent=1 // pred_region
      _
    $region21: #{tpu_custom_call.1} parent=1 // pred_fallthru
      _
    // Predicated region
    $region22: #{tpu_custom_call.1} parent=1 // pred_check
      _
    $region23: #{tpu_custom_call.1} parent=1 // pred_check_branch
      %37 = sbr.rel (0) target = $region25
    $region24: #{tpu_custom_call.1} parent=1 // pred_region
      %s39 = ssub.s32 1024, 1024
      %40 = vsyncadd [#allocation5], %s39
      %s41 = sshll.u32 [#allocation4], 4
      %s42 = int_to_ptr.vmem [resolvable:$true] %s41
      %47 = dma.hbm_to_vmem [thread:$0]  %s5, 1024, %s42, [#allocation5], 64, 64, 4
    $region25: #{tpu_custom_call.1} parent=1 // pred_fallthru
      _
    // Predicated region
    $region26: #{tpu_custom_call.1} parent=1 // pred_check
      _
    $region27: #{tpu_custom_call.1} parent=1 // pred_check_branch
      %49 = sbr.rel (0) target = $region29
    $region28: #{tpu_custom_call.1} parent=1 // pred_region
      _
    $region29: #{tpu_custom_call.1} parent=1 // pred_fallthru
      _
    // Predicated region
    $region30: #{tpu_custom_call.1} parent=1 // pred_check
      _
    $region31: #{tpu_custom_call.1} parent=1 // pred_check_branch
      %51 = sbr.rel (0) target = $region33
    $region32: #{tpu_custom_call.1} parent=1 // pred_region
      _
    $region33: #{tpu_custom_call.1} parent=1 // pred_fallthru
      _
    // Predicated region
    $region34: #{tpu_custom_call.1} parent=1 // pred_check
      _
    $region35: #{tpu_custom_call.1} parent=1 // pred_check_branch
      %53 = sbr.rel (0) target = $region37
    $region36: #{tpu_custom_call.1} parent=1 // pred_region
      _
    $region37: #{tpu_custom_call.1} parent=1 // pred_fallthru
      _
    // Predicated region
    $region38: #{tpu_custom_call.1} parent=1 // pred_check
      _
    $region39: #{tpu_custom_call.1} parent=1 // pred_check_branch
      %55 = sbr.rel (0) target = $region41
    $region40: #{tpu_custom_call.1} parent=1 // pred_region
      %56 = dma.done [#allocation3], 128
    $region41: #{tpu_custom_call.1} parent=1 // pred_fallthru
      _
    // Predicated region
    $region42: #{tpu_custom_call.1} parent=1 // pred_check
      _
    $region43: #{tpu_custom_call.1} parent=1 // pred_check_branch
      %58 = sbr.rel (0) target = $region45
    $region44: #{tpu_custom_call.1} parent=1 // pred_region
      %59 = dma.done [#allocation5], 1024
    $region45: #{tpu_custom_call.1} parent=1 // pred_fallthru
      _
    %v61 = vld [vmem:[%s0] sm:$0xff]
    %v62 = vld [vmem:[#allocation2] sm:$0xf]
    %v63 = vld [vmem:[#allocation2 + $0x4] sm:$0xf]
    %v64 = vld [vmem:[%s2] sm:$0x1]
    %v65 = vpack.c.bf16 %v61, %v61
    %v67 = vlaneseq
    %v68 = vshrl.u32 %v67, 7
    %v69 = vsub.s32 0, %v68
    %v70 = vrot.slane %v64, %v69
    %v74 = vunpack.c.l.b16 %v62
    %v75 = vunpack.c.l.b16 %v63
    %v76 = vpack.c.b16 %v75, %v74
    %vm78 = vcmask 130048
    %v80 = vsel %vm78, %v65, 0
    %82 = vmatprep.subr.bf16.mxu0 0
    %83 = vmatpush1.bf16.msra.mxu0 %v76
    %84 = vmatprep.subr.bf16.mxu0 0
    %85 = vmatpush1.bf16.msra.mxu0 0
    %86 = vmatprep.subr.bf16.mxu0 0
    %87 = vmatpush1.bf16.msra.mxu0 0
    %88 = vmatprep.subr.bf16.mxu0 0
    %89 = vmatpush1.bf16.msra.mxu0 0
    %90 = vmatprep.subr.bf16.mxu0 0
    %91 = vmatpush1.bf16.msra.mxu0 0
    %92 = vmatprep.subr.bf16.mxu0 0
    %93 = vmatpush1.bf16.msra.mxu0 0
    %94 = vmatprep.subr.bf16.mxu0 0
    %95 = vmatpush1.bf16.msra.mxu0 0
    %96 = vmatprep.subr.bf16.mxu0 0
    %97 = vmatpush1.bf16.msra.mxu0 0
    %98 = vmatprep.subr.bf16.mxu0 0
    %99 = vmatpush1.bf16.msra.mxu0 0
    %100 = vmatprep.subr.bf16.mxu0 0
    %101 = vmatpush1.bf16.msra.mxu0 0
    %102 = vmatprep.subr.bf16.mxu0 0
    %103 = vmatpush1.bf16.msra.mxu0 0
    %104 = vmatprep.subr.bf16.mxu0 0
    %105 = vmatpush1.bf16.msra.mxu0 0
    %106 = vmatprep.subr.bf16.mxu0 0
    %107 = vmatpush1.bf16.msra.mxu0 0
    %108 = vmatprep.subr.bf16.mxu0 0
    %109 = vmatpush1.bf16.msra.mxu0 0
    %110 = vmatprep.subr.bf16.mxu0 0
    %111 = vmatpush1.bf16.msra.mxu0 0
    %112 = vmatprep.subr.bf16.mxu0 0
    %113 = vmatpush1.bf16.msra.mxu0 0
    %114 = vmatprep.mubr.bf16.mxu0 0
    %115 = vmatmul.mubr.bf16.gmra.mrb[0].mxu0 %v80
    %v116 = vpop.f32.mrb[0].mxu0
    %v117 = vadd.f32 %v70, %v116
    %v118 = vpop.f32.mrb[0].mxu0
    %v119 = vpop.f32.mrb[0].mxu0
    %v120 = vpop.f32.mrb[0].mxu0
    %121 = vdwg.mxu0
    %v122 = vmax.f32 %v117, 0.0
    %v123 = vld [vmem:[%s3] sm:$0xf]
    %v124 = vld [vmem:[%s3 + $0x4] sm:$0xf]
    %v125 = vld [vmem:[%s3 + $0x8] sm:$0xf]
    %v126 = vld [vmem:[%s3 + $0xc] sm:$0xf]
    %v127 = vld [vmem:[%s3 + $0x10] sm:$0xf]
    %v128 = vld [vmem:[%s3 + $0x14] sm:$0xf]
    %v129 = vld [vmem:[%s3 + $0x18] sm:$0xf]
    %v130 = vld [vmem:[%s3 + $0x1c] sm:$0xf]
    %v131 = vld [vmem:[%s3 + $0x20] sm:$0xf]
    %v132 = vld [vmem:[%s3 + $0x24] sm:$0xf]
    %v133 = vld [vmem:[%s3 + $0x28] sm:$0xf]
    %v134 = vld [vmem:[%s3 + $0x2c] sm:$0xf]
    %v135 = vld [vmem:[%s3 + $0x30] sm:$0xf]
    %v136 = vld [vmem:[%s3 + $0x34] sm:$0xf]
    %v137 = vld [vmem:[%s3 + $0x38] sm:$0xf]
    %v138 = vld [vmem:[%s3 + $0x3c] sm:$0xf]
    %v139 = vld [vmem:[%s4] sm:$0x1]
    %v140 = vpack.c.bf16 %v122, %v122
    %v142 = vlaneseq
    %v143 = vshrl.u32 %v142, 7
    %v144 = vsub.s32 0, %v143
    %v145 = vrot.slane %v139, %v144
    %v163 = vunpack.c.l.b16 %v123
    %v164 = vunpack.c.l.b16 %v124
    %v165 = vunpack.c.l.b16 %v125
    %v166 = vunpack.c.l.b16 %v126
    %v167 = vunpack.c.l.b16 %v127
    %v168 = vunpack.c.l.b16 %v128
    %v169 = vunpack.c.l.b16 %v129
    %v170 = vunpack.c.l.b16 %v130
    %v171 = vunpack.c.l.b16 %v131
    %v172 = vunpack.c.l.b16 %v132
    %v173 = vunpack.c.l.b16 %v133
    %v174 = vunpack.c.l.b16 %v134
    %v175 = vunpack.c.l.b16 %v135
    %v176 = vunpack.c.l.b16 %v136
    %v177 = vunpack.c.l.b16 %v137
    %v178 = vunpack.c.l.b16 %v138
    %v179 = vpack.c.b16 %v164, %v163
    %v180 = vpack.c.b16 %v166, %v165
    %v181 = vpack.c.b16 %v168, %v167
    %v182 = vpack.c.b16 %v170, %v169
    %v183 = vpack.c.b16 %v172, %v171
    %v184 = vpack.c.b16 %v174, %v173
    %v185 = vpack.c.b16 %v176, %v175
    %v186 = vpack.c.b16 %v178, %v177
    %195 = vmatprep.subr.bf16.mxu0 0
    %196 = vmatpush1.bf16.msra.mxu0 %v179
    %197 = vmatprep.subr.bf16.mxu0 0
    %198 = vmatpush1.bf16.msra.mxu0 %v180
    %199 = vmatprep.subr.bf16.mxu0 0
    %200 = vmatpush1.bf16.msra.mxu0 %v181
    %201 = vmatprep.subr.bf16.mxu0 0
    %202 = vmatpush1.bf16.msra.mxu0 %v182
    %203 = vmatprep.subr.bf16.mxu0 0
    %204 = vmatpush1.bf16.msra.mxu0 %v183
    %205 = vmatprep.subr.bf16.mxu0 0
    %206 = vmatpush1.bf16.msra.mxu0 %v184
    %207 = vmatprep.subr.bf16.mxu0 0
    %208 = vmatpush1.bf16.msra.mxu0 %v185
    %209 = vmatprep.subr.bf16.mxu0 0
    %210 = vmatpush1.bf16.msra.mxu0 %v186
    %211 = vmatprep.subr.bf16.mxu0 0
    %212 = vmatpush1.bf16.msra.mxu0 0
    %213 = vmatprep.subr.bf16.mxu0 0
    %214 = vmatpush1.bf16.msra.mxu0 0
    %215 = vmatprep.subr.bf16.mxu0 0
    %216 = vmatpush1.bf16.msra.mxu0 0
    %217 = vmatprep.subr.bf16.mxu0 0
    %218 = vmatpush1.bf16.msra.mxu0 0
    %219 = vmatprep.subr.bf16.mxu0 0
    %220 = vmatpush1.bf16.msra.mxu0 0
    %221 = vmatprep.subr.bf16.mxu0 0
    %222 = vmatpush1.bf16.msra.mxu0 0
    %223 = vmatprep.subr.bf16.mxu0 0
    %224 = vmatpush1.bf16.msra.mxu0 0
    %225 = vmatprep.subr.bf16.mxu0 0
    %226 = vmatpush1.bf16.msra.mxu0 0
    %227 = vmatprep.mubr.bf16.mxu0 0
    %228 = vmatmul.mubr.bf16.gmra.mrb[0].mxu0 %v140
    %v229 = vpop.f32.mrb[0].mxu0
    %v230 = vadd.f32 %v145, %v229
    %v231 = vpop.f32.mrb[0].mxu0
    %v232 = vpop.f32.mrb[0].mxu0
    %v233 = vpop.f32.mrb[0].mxu0
    %234 = vdwg.mxu0
    %v235 = vmax.f32 %v230, 0.0
    %v236 = vld [vmem:[#allocation4] sm:$0xf]
    %v237 = vld [vmem:[#allocation4 + $0x4] sm:$0xf]
    %v238 = vld [vmem:[#allocation4 + $0x8] sm:$0xf]
    %v239 = vld [vmem:[#allocation4 + $0xc] sm:$0xf]
    %v240 = vld [vmem:[#allocation4 + $0x10] sm:$0xf]
    %v241 = vld [vmem:[#allocation4 + $0x14] sm:$0xf]
    %v242 = vld [vmem:[#allocation4 + $0x18] sm:$0xf]
    %v243 = vld [vmem:[#allocation4 + $0x1c] sm:$0xf]
    %v244 = vld [vmem:[#allocation4 + $0x20] sm:$0xf]
    %v245 = vld [vmem:[#allocation4 + $0x24] sm:$0xf]
    %v246 = vld [vmem:[#allocation4 + $0x28] sm:$0xf]
    %v247 = vld [vmem:[#allocation4 + $0x2c] sm:$0xf]
    %v248 = vld [vmem:[#allocation4 + $0x30] sm:$0xf]
    %v249 = vld [vmem:[#allocation4 + $0x34] sm:$0xf]
    %v250 = vld [vmem:[#allocation4 + $0x38] sm:$0xf]
    %v251 = vld [vmem:[#allocation4 + $0x3c] sm:$0xf]
    %v252 = vld [vmem:[%s6] sm:$0x1]
    %v253 = vpack.c.bf16 %v235, %v235
    %v255 = vlaneseq
    %v256 = vshrl.u32 %v255, 7
    %v257 = vsub.s32 0, %v256
    %v258 = vrot.slane %v252, %v257
    %v276 = vunpack.c.l.b16 %v236
    %v277 = vunpack.c.l.b16 %v237
    %v278 = vunpack.c.l.b16 %v238
    %v279 = vunpack.c.l.b16 %v239
    %v280 = vunpack.c.l.b16 %v240
    %v281 = vunpack.c.l.b16 %v241
    %v282 = vunpack.c.l.b16 %v242
    %v283 = vunpack.c.l.b16 %v243
    %v284 = vunpack.c.l.b16 %v244
    %v285 = vunpack.c.l.b16 %v245
    %v286 = vunpack.c.l.b16 %v246
    %v287 = vunpack.c.l.b16 %v247
    %v288 = vunpack.c.l.b16 %v248
    %v289 = vunpack.c.l.b16 %v249
    %v290 = vunpack.c.l.b16 %v250
    %v291 = vunpack.c.l.b16 %v251
    %v292 = vpack.c.b16 %v277, %v276
    %v293 = vpack.c.b16 %v279, %v278
    %v294 = vpack.c.b16 %v281, %v280
    %v295 = vpack.c.b16 %v283, %v282
    %v296 = vpack.c.b16 %v285, %v284
    %v297 = vpack.c.b16 %v287, %v286
    %v298 = vpack.c.b16 %v289, %v288
    %v299 = vpack.c.b16 %v291, %v290
    %308 = vmatprep.subr.bf16.mxu0 0
    %309 = vmatpush1.bf16.msra.mxu0 %v292
    %310 = vmatprep.subr.bf16.mxu0 0
    %311 = vmatpush1.bf16.msra.mxu0 %v293
    %312 = vmatprep.subr.bf16.mxu0 0
    %313 = vmatpush1.bf16.msra.mxu0 %v294
    %314 = vmatprep.subr.bf16.mxu0 0
    %315 = vmatpush1.bf16.msra.mxu0 %v295
    %316 = vmatprep.subr.bf16.mxu0 0
    %317 = vmatpush1.bf16.msra.mxu0 %v296
    %318 = vmatprep.subr.bf16.mxu0 0
    %319 = vmatpush1.bf16.msra.mxu0 %v297
    %320 = vmatprep.subr.bf16.mxu0 0
    %321 = vmatpush1.bf16.msra.mxu0 %v298
    %322 = vmatprep.subr.bf16.mxu0 0
    %323 = vmatpush1.bf16.msra.mxu0 %v299
    %324 = vmatprep.subr.bf16.mxu0 0
    %325 = vmatpush1.bf16.msra.mxu0 0
    %326 = vmatprep.subr.bf16.mxu0 0
    %327 = vmatpush1.bf16.msra.mxu0 0
    %328 = vmatprep.subr.bf16.mxu0 0
    %329 = vmatpush1.bf16.msra.mxu0 0
    %330 = vmatprep.subr.bf16.mxu0 0
    %331 = vmatpush1.bf16.msra.mxu0 0
    %332 = vmatprep.subr.bf16.mxu0 0
    %333 = vmatpush1.bf16.msra.mxu0 0
    %334 = vmatprep.subr.bf16.mxu0 0
    %335 = vmatpush1.bf16.msra.mxu0 0
    %336 = vmatprep.subr.bf16.mxu0 0
    %337 = vmatpush1.bf16.msra.mxu0 0
    %338 = vmatprep.subr.bf16.mxu0 0
    %339 = vmatpush1.bf16.msra.mxu0 0
    %340 = vmatprep.mubr.bf16.mxu0 0
    %341 = vmatmul.mubr.bf16.gmra.mrb[0].mxu0 %v253
    %v342 = vpop.f32.mrb[0].mxu0
    %v343 = vadd.f32 %v258, %v342
    %v344 = vpop.f32.mrb[0].mxu0
    %v345 = vpop.f32.mrb[0].mxu0
    %v346 = vpop.f32.mrb[0].mxu0
    %347 = vdwg.mxu0
    %v348 = vmax.f32 %v343, 0.0
    %v349 = vld [vmem:[%s7] sm:$0xf]
    %v350 = vld [vmem:[%s7 + $0x4] sm:$0xf]
    %v351 = vld [vmem:[%s7 + $0x8] sm:$0xf]
    %v352 = vld [vmem:[%s7 + $0xc] sm:$0xf]
    %v353 = vld [vmem:[%s7 + $0x10] sm:$0xf]
    %v354 = vld [vmem:[%s7 + $0x14] sm:$0xf]
    %v355 = vld [vmem:[%s7 + $0x18] sm:$0xf]
    %v356 = vld [vmem:[%s7 + $0x1c] sm:$0xf]
    %v357 = vld [vmem:[%s7 + $0x20] sm:$0xf]
    %v358 = vld [vmem:[%s7 + $0x24] sm:$0xf]
    %v359 = vld [vmem:[%s7 + $0x28] sm:$0xf]
    %v360 = vld [vmem:[%s7 + $0x2c] sm:$0xf]
    %v361 = vld [vmem:[%s7 + $0x30] sm:$0xf]
    %v362 = vld [vmem:[%s7 + $0x34] sm:$0xf]
    %v363 = vld [vmem:[%s7 + $0x38] sm:$0xf]
    %v364 = vld [vmem:[%s7 + $0x3c] sm:$0xf]
    %v365 = vld [vmem:[%s8] sm:$0x1]
    %v366 = vpack.c.bf16 %v348, %v348
    %v368 = vlaneseq
    %v369 = vshrl.u32 %v368, 7
    %v370 = vsub.s32 0, %v369
    %v371 = vrot.slane %v365, %v370
    %v389 = vunpack.c.l.b16 %v349
    %v390 = vunpack.c.l.b16 %v350
    %v391 = vunpack.c.l.b16 %v351
    %v392 = vunpack.c.l.b16 %v352
    %v393 = vunpack.c.l.b16 %v353
    %v394 = vunpack.c.l.b16 %v354
    %v395 = vunpack.c.l.b16 %v355
    %v396 = vunpack.c.l.b16 %v356
    %v397 = vunpack.c.l.b16 %v357
    %v398 = vunpack.c.l.b16 %v358
    %v399 = vunpack.c.l.b16 %v359
    %v400 = vunpack.c.l.b16 %v360
    %v401 = vunpack.c.l.b16 %v361
    %v402 = vunpack.c.l.b16 %v362
    %v403 = vunpack.c.l.b16 %v363
    %v404 = vunpack.c.l.b16 %v364
    %v405 = vpack.c.b16 %v390, %v389
    %v406 = vpack.c.b16 %v392, %v391
    %v407 = vpack.c.b16 %v394, %v393
    %v408 = vpack.c.b16 %v396, %v395
    %v409 = vpack.c.b16 %v398, %v397
    %v410 = vpack.c.b16 %v400, %v399
    %v411 = vpack.c.b16 %v402, %v401
    %v412 = vpack.c.b16 %v404, %v403
    %421 = vmatprep.subr.bf16.mxu0 0
    %422 = vmatpush1.bf16.msra.mxu0 %v405
    %423 = vmatprep.subr.bf16.mxu0 0
    %424 = vmatpush1.bf16.msra.mxu0 %v406
    %425 = vmatprep.subr.bf16.mxu0 0
    %426 = vmatpush1.bf16.msra.mxu0 %v407
    %427 = vmatprep.subr.bf16.mxu0 0
    %428 = vmatpush1.bf16.msra.mxu0 %v408
    %429 = vmatprep.subr.bf16.mxu0 0
    %430 = vmatpush1.bf16.msra.mxu0 %v409
    %431 = vmatprep.subr.bf16.mxu0 0
    %432 = vmatpush1.bf16.msra.mxu0 %v410
    %433 = vmatprep.subr.bf16.mxu0 0
    %434 = vmatpush1.bf16.msra.mxu0 %v411
    %435 = vmatprep.subr.bf16.mxu0 0
    %436 = vmatpush1.bf16.msra.mxu0 %v412
    %437 = vmatprep.subr.bf16.mxu0 0
    %438 = vmatpush1.bf16.msra.mxu0 0
    %439 = vmatprep.subr.bf16.mxu0 0
    %440 = vmatpush1.bf16.msra.mxu0 0
    %441 = vmatprep.subr.bf16.mxu0 0
    %442 = vmatpush1.bf16.msra.mxu0 0
    %443 = vmatprep.subr.bf16.mxu0 0
    %444 = vmatpush1.bf16.msra.mxu0 0
    %445 = vmatprep.subr.bf16.mxu0 0
    %446 = vmatpush1.bf16.msra.mxu0 0
    %447 = vmatprep.subr.bf16.mxu0 0
    %448 = vmatpush1.bf16.msra.mxu0 0
    %449 = vmatprep.subr.bf16.mxu0 0
    %450 = vmatpush1.bf16.msra.mxu0 0
    %451 = vmatprep.subr.bf16.mxu0 0
    %452 = vmatpush1.bf16.msra.mxu0 0
    %453 = vmatprep.mubr.bf16.mxu0 0
    %454 = vmatmul.mubr.bf16.gmra.mrb[0].mxu0 %v366
    %v455 = vpop.f32.mrb[0].mxu0
    %v456 = vadd.f32 %v371, %v455
    %v457 = vpop.f32.mrb[0].mxu0
    %v458 = vpop.f32.mrb[0].mxu0
    %v459 = vpop.f32.mrb[0].mxu0
    %460 = vdwg.mxu0
    %vm461 = vcmask 31744
    %462 = vst.msk [vmem:[%s9] sm:$0xff] %vm461, %v456
    // Predicated region
    $region46: #{tpu_custom_call.1} parent=1 // pred_check
      _
    $region47: #{tpu_custom_call.1} parent=1 // pred_check_branch
      %464 = sbr.rel (0) target = $region49
    $region48: #{tpu_custom_call.1} parent=1 // pred_region
      _
    $region49: #{tpu_custom_call.1} parent=1 // pred_fallthru
      _
    // Predicated region
    $region50: #{tpu_custom_call.1} parent=1 // pred_check
      _
    $region51: #{tpu_custom_call.1} parent=1 // pred_check_branch
      %466 = sbr.rel (0) target = $region53
    $region52: #{tpu_custom_call.1} parent=1 // pred_region
      _
    $region53: #{tpu_custom_call.1} parent=1 // pred_fallthru
      _
    %467 = vsyncpa [#allocation3], 1
    %468 = vsyncpa [#allocation5], 1

</llo_original>
